<compile_context>
chip_gen: v7x
topology: tpu7x:2x2x1
jax: 0.10.0
libtpu: 0.0.40
codegen_flags: <defaults>
</compile_context>

<pallas_src>
import functools

import jax
import jax.numpy as jnp
from jax.experimental import pallas as pl
from jax.experimental.pallas import tpu as pltpu


def _round_up(v, m):
    return ((v + m - 1) // m) * m


def _mlp_kernel(num_layers, *refs):
    """refs = (x_ref, w1_ref, b1_ref, ..., wL_ref, bL_ref, o_ref).

    x_ref : (TM, D_in)       row tile, compute dtype (bf16)
    wi_ref: (D_{i-1}, D_i)   pre-transposed weight (in, out), compute dtype
    bi_ref: (1, D_i)         bias, broadcast over rows
    o_ref : (TM, D_out_pad)  lane-dense output tile
    """
    x_ref = refs[0]
    o_ref = refs[-1]
    wb = refs[1:-1]

    h = x_ref[...]                                   # native bf16 -> MXU-friendly
    for i in range(num_layers):
        w = wb[2 * i][...]
        b = wb[2 * i + 1][...]
        # bf16 x bf16 matmul with f32 accumulation; bias add / ReLU in f32.
        y = jnp.dot(h, w, preferred_element_type=jnp.float32) + b
        if i < num_layers - 1:
            y = jnp.maximum(y, 0.0)                  # ReLU on all but last layer
            h = y.astype(w.dtype)                    # back to bf16 for next dot
        else:
            h = y
    o_ref[...] = h.astype(o_ref.dtype)


def prepare_mlp_params(weights, biases, compute_dtype=jnp.bfloat16):
    """One-time parameter prep (hoisted out of the forward path).

    weights: list of (out_i, in_i) arrays (PyTorch nn.Linear layout)
    biases : list of (out_i,) arrays
    Returns a dict with pre-transposed (in, out) weights / (1, out) biases in
    `compute_dtype`, with the last layer's output dim zero-padded to a
    multiple of 128 for lane-dense stores.
    """
    num_layers = len(weights)
    assert len(biases) == num_layers and num_layers >= 1
    wts, bss = [], []
    for w, b in zip(weights, biases):
        wts.append(jnp.asarray(w).T.astype(compute_dtype))
        bss.append(jnp.asarray(b).reshape(1, -1).astype(compute_dtype))
    d_out = wts[-1].shape[1]
    d_out_pad = _round_up(max(d_out, 1), 128)
    if d_out_pad != d_out:
        wts[-1] = jnp.pad(wts[-1], ((0, 0), (0, d_out_pad - d_out)))
        bss[-1] = jnp.pad(bss[-1], ((0, 0), (0, d_out_pad - d_out)))
    return {"wts": wts, "bss": bss, "d_out": d_out, "compute_dtype": compute_dtype}


def _row_tile(n, cap=1024):
    """Row tile: multiple of 8 (sublane granularity), large to amortize the
    ~0.35 us/step overhead, but always producing >= 2 grid steps so v7x's two
    TensorCores both get work (harmless on single-TC v5e/v6e)."""
    if n <= 8:
        return max(n, 1)
    half = (n + 1) // 2
    return min(_round_up(half, 8), cap)


def _vmem_limit_bytes(tm, d_in, widths, wts, bss, comp_itemsize):
    """Conservative VMEM footprint estimate -> explicit limit, clamped to the
    v7x per-TensorCore capacity (64 MiB)."""
    pad2 = lambda r, c: _round_up(max(r, 1), 8) * _round_up(max(c, 1), 128)
    est = 2 * pad2(tm, d_in) * comp_itemsize                   # x, double-buffered
    est += 2 * pad2(tm, widths[-1]) * comp_itemsize            # out, double-buffered
    for w in wts:                                              # resident weights
        est += pad2(w.shape[0], w.shape[1]) * comp_itemsize
    for b in bss:
        est += pad2(1, b.shape[1]) * comp_itemsize
    est += 4 * pad2(tm, max(widths)) * 4                       # f32 intermediates
    limit = int(est * 1.25) + (1 << 20)
    return max(32 << 20, min(limit, 64 << 20))


def mlp_forward(x, params):
    """Fused MLP forward.

    x      : (..., D_in), any float dtype (streamed in params['compute_dtype'])
    params : output of prepare_mlp_params
    returns: (..., D_out) in params['compute_dtype']
    """
    wts, bss = params["wts"], params["bss"]
    d_out, compute_dtype = params["d_out"], params["compute_dtype"]
    num_layers = len(wts)

    orig_lead = x.shape[:-1]
    d_in = x.shape[-1]
    assert wts[0].shape[0] == d_in
    n = 1
    for s in orig_lead:
        n *= s
    if n == 0:                                    # empty batch guard
        return jnp.zeros((*orig_lead, d_out), compute_dtype)

    x2 = x.reshape(n, d_in).astype(compute_dtype)
    d_out_pad = wts[-1].shape[1]
    widths = [d_in] + [w.shape[1] for w in wts]

    tm = _row_tile(n)
    grid = (pl.cdiv(n, tm),)

    comp_itemsize = jnp.dtype(compute_dtype).itemsize
    flops = 0
    prev = d_in
    for w in wts:
        flops += 2 * n * prev * w.shape[1]
        prev = w.shape[1]
    bytes_accessed = comp_itemsize * (
        int(x2.size) + n * d_out_pad
        + sum(int(w.size) for w in wts) + sum(int(b.size) for b in bss)
    )

    operands = [x2]
    for w, b in zip(wts, bss):
        operands.append(w)
        operands.append(b)

    def _call(single_buffer_resident):
        def resident_spec(shape):
            # Grid-invariant operand (constant index_map): stays VMEM-resident.
            if single_buffer_resident:
                return pl.BlockSpec(shape, lambda i: (0, 0),
                                    pipeline_mode=pl.Buffered(1))
            return pl.BlockSpec(shape, lambda i: (0, 0))

        in_specs = [pl.BlockSpec((tm, d_in), lambda i: (i, 0))]
        for w, b in zip(wts, bss):
            in_specs.append(resident_spec(w.shape))
            in_specs.append(resident_spec(b.shape))
        out_specs = pl.BlockSpec((tm, d_out_pad), lambda i: (i, 0))

        return pl.pallas_call(
            functools.partial(_mlp_kernel, num_layers),
            out_shape=jax.ShapeDtypeStruct((n, d_out_pad), compute_dtype),
            grid=grid,
            in_specs=in_specs,
            out_specs=out_specs,
            compiler_params=pltpu.CompilerParams(
                dimension_semantics=("parallel",),   # shard rows across TCs on v7x
                vmem_limit_bytes=_vmem_limit_bytes(
                    tm, d_in, widths, wts, bss, comp_itemsize),
            ),
            cost_estimate=pl.CostEstimate(
                flops=flops, transcendentals=0, bytes_accessed=bytes_accessed),
        )(*operands)

    try:
        out = _call(True)
    except Exception:
        # Fallback if single-buffered (Buffered(1)) resident specs are not
        # supported by the installed jax; default double buffering instead.
        out = _call(False)

    out = out[:, :d_out]                           # drop lane padding
    return out.reshape(*orig_lead, d_out)


def mlp_reference(x, weights, biases):
    """Plain-JAX f32 reference matching the PyTorch MLP.forward."""
    num_layers = len(weights)
    h = x
    for i, (w, b) in enumerate(zip(weights, biases)):
        h = jnp.dot(h, w.T) + b
        if i < num_layers - 1:
            h = jnp.maximum(h, 0.0)
    return h


if __name__ == "__main__":
    key = jax.random.PRNGKey(0)

    # Small shapes consistent with the module: x (batch=2, seq=8, input_dim=4),
    # hidden_dim=32, output_dim=4, num_layers=3 (deformable-DETR bbox-head style).
    B, S = 2, 8
    input_dim, hidden_dim, output_dim, num_layers = 4, 32, 4, 3
    dims = [input_dim] + [hidden_dim] * (num_layers - 1) + [output_dim]

    keys = jax.random.split(key, 1 + 2 * num_layers)
    x = jax.random.normal(keys[0], (B, S, input_dim), jnp.float32)

    weights, biases = [], []
    for i in range(num_layers):
        fan_in, fan_out = dims[i], dims[i + 1]
        bound = 1.0 / (fan_in ** 0.5)  # torch nn.Linear default init range
        w = jax.random.uniform(keys[1 + 2 * i], (fan_out, fan_in), jnp.float32,
                               -bound, bound)
        b = jax.random.uniform(keys[2 + 2 * i], (fan_out,), jnp.float32,
                               -bound, bound)
        weights.append(w)
        biases.append(b)

    # Parameter prep (transpose / bf16 cast / lane padding) done once, outside
    # the forward path.
    params = prepare_mlp_params(weights, biases, compute_dtype=jnp.bfloat16)

    out = mlp_forward(x, params)
    out = jax.block_until_ready(out)

    ref = mlp_reference(x, weights, biases)
    assert out.shape == (B, S, output_dim)
    # bf16 data path: compare against the f32 reference with bf16-appropriate
    # tolerances (deliberately looser than the old 1e-5 f32 check).
    assert jnp.allclose(out.astype(jnp.float32), ref, atol=5e-2, rtol=5e-2), \
        "mismatch vs reference"

    print("KERNEL_OK")
</pallas_src>

<mosaic_0001>
module attributes {stable_mosaic.version = 11 : i64} {
  func.func @_mlp_kernel(%arg0: i32, %arg1: memref<8x4xbf16, #tpu.memory_space<vmem>>, %arg2: memref<4x32xbf16, #tpu.memory_space<vmem>>, %arg3: memref<1x32xbf16, #tpu.memory_space<vmem>>, %arg4: memref<32x32xbf16, #tpu.memory_space<vmem>>, %arg5: memref<1x32xbf16, #tpu.memory_space<vmem>>, %arg6: memref<32x128xbf16, #tpu.memory_space<vmem>>, %arg7: memref<1x128xbf16, #tpu.memory_space<vmem>>, %arg8: memref<8x128xbf16, #tpu.memory_space<vmem>>) attributes {dimension_semantics = [#tpu.dimension_semantics<parallel>], iteration_bounds = array<i64: 2>, scalar_prefetch = 0 : i64, scratch_operands = 0 : i64, tpu.core_type = #tpu.core_type<tc>, window_params = [{transform_indices = @transform_0, window_bounds = array<i64: 8, 4>}, {pipeline_mode = #tpu.pipeline_mode<synchronous>, transform_indices = @transform_1, window_bounds = array<i64: 4, 32>}, {pipeline_mode = #tpu.pipeline_mode<synchronous>, transform_indices = @transform_2, window_bounds = array<i64: 1, 32>}, {pipeline_mode = #tpu.pipeline_mode<synchronous>, transform_indices = @transform_3, window_bounds = array<i64: 32, 32>}, {pipeline_mode = #tpu.pipeline_mode<synchronous>, transform_indices = @transform_4, window_bounds = array<i64: 1, 32>}, {pipeline_mode = #tpu.pipeline_mode<synchronous>, transform_indices = @transform_5, window_bounds = array<i64: 32, 128>}, {pipeline_mode = #tpu.pipeline_mode<synchronous>, transform_indices = @transform_6, window_bounds = array<i64: 1, 128>}, {transform_indices = @transform_7, window_bounds = array<i64: 8, 128>}]} {
    %c0 = arith.constant 0 : index
    %c0_0 = arith.constant 0 : index
    %0 = vector.load %arg1[%c0, %c0_0] : memref<8x4xbf16, #tpu.memory_space<vmem>>, vector<8x4xbf16>
    %c0_1 = arith.constant 0 : index
    %c0_2 = arith.constant 0 : index
    %1 = vector.load %arg2[%c0_1, %c0_2] : memref<4x32xbf16, #tpu.memory_space<vmem>>, vector<4x32xbf16>
    %c0_3 = arith.constant 0 : index
    %c0_4 = arith.constant 0 : index
    %2 = vector.load %arg3[%c0_3, %c0_4] : memref<1x32xbf16, #tpu.memory_space<vmem>>, vector<1x32xbf16>
    %cst = arith.constant dense<0.000000e+00> : vector<8x32xf32>
    %3 = tpu.matmul %0, %1, %cst {dimension_numbers = #tpu.dot_dimension_numbers<[1], [0], [0], [1], [0, 0, 1, 1], [], []>} : vector<8x4xbf16>, vector<4x32xbf16>, vector<8x32xf32> -> vector<8x32xf32>
    %4 = arith.extf %2 : vector<1x32xbf16> to vector<1x32xf32>
    %5 = vector.broadcast %4 : vector<1x32xf32> to vector<8x32xf32>
    %6 = arith.addf %3, %5 : vector<8x32xf32>
    %cst_5 = arith.constant 0.000000e+00 : f32
    %7 = vector.broadcast %cst_5 : f32 to vector<8x32xf32>
    %8 = arith.maximumf %6, %7 : vector<8x32xf32>
    %9 = arith.truncf %8 : vector<8x32xf32> to vector<8x32xbf16>
    %c0_6 = arith.constant 0 : index
    %c0_7 = arith.constant 0 : index
    %10 = vector.load %arg4[%c0_6, %c0_7] : memref<32x32xbf16, #tpu.memory_space<vmem>>, vector<32x32xbf16>
    %c0_8 = arith.constant 0 : index
    %c0_9 = arith.constant 0 : index
    %11 = vector.load %arg5[%c0_8, %c0_9] : memref<1x32xbf16, #tpu.memory_space<vmem>>, vector<1x32xbf16>
    %cst_10 = arith.constant dense<0.000000e+00> : vector<8x32xf32>
    %12 = tpu.matmul %9, %10, %cst_10 {dimension_numbers = #tpu.dot_dimension_numbers<[1], [0], [0], [1], [0, 0, 1, 1], [], []>} : vector<8x32xbf16>, vector<32x32xbf16>, vector<8x32xf32> -> vector<8x32xf32>
    %13 = arith.extf %11 : vector<1x32xbf16> to vector<1x32xf32>
    %14 = vector.broadcast %13 : vector<1x32xf32> to vector<8x32xf32>
    %15 = arith.addf %12, %14 : vector<8x32xf32>
    %cst_11 = arith.constant 0.000000e+00 : f32
    %16 = vector.broadcast %cst_11 : f32 to vector<8x32xf32>
    %17 = arith.maximumf %15, %16 : vector<8x32xf32>
    %18 = arith.truncf %17 : vector<8x32xf32> to vector<8x32xbf16>
    %c0_12 = arith.constant 0 : index
    %c0_13 = arith.constant 0 : index
    %19 = vector.load %arg6[%c0_12, %c0_13] : memref<32x128xbf16, #tpu.memory_space<vmem>>, vector<32x128xbf16>
    %c0_14 = arith.constant 0 : index
    %c0_15 = arith.constant 0 : index
    %20 = vector.load %arg7[%c0_14, %c0_15] : memref<1x128xbf16, #tpu.memory_space<vmem>>, vector<1x128xbf16>
    %cst_16 = arith.constant dense<0.000000e+00> : vector<8x128xf32>
    %21 = tpu.matmul %18, %19, %cst_16 {dimension_numbers = #tpu.dot_dimension_numbers<[1], [0], [0], [1], [0, 0, 1, 1], [], []>} : vector<8x32xbf16>, vector<32x128xbf16>, vector<8x128xf32> -> vector<8x128xf32>
    %22 = arith.extf %20 : vector<1x128xbf16> to vector<1x128xf32>
    %23 = vector.broadcast %22 : vector<1x128xf32> to vector<8x128xf32>
    %24 = arith.addf %21, %23 : vector<8x128xf32>
    %25 = arith.truncf %24 : vector<8x128xf32> to vector<8x128xbf16>
    %c0_17 = arith.constant 0 : index
    %c0_18 = arith.constant 0 : index
    %26 = vector.load %arg8[%c0_17, %c0_18] : memref<8x128xbf16, #tpu.memory_space<vmem>>, vector<8x128xbf16>
    tpu.vector_store %arg8[%c0_17, %c0_18], %25 {strides = array<i32>} : memref<8x128xbf16, #tpu.memory_space<vmem>>, vector<8x128xbf16>,
    return
  }
  func.func @transform_0(%arg0: i32) -> (i32, i32) {
    %c0_i32 = arith.constant 0 : i32
    %c0_i32_0 = arith.constant 0 : i32
    return %arg0, %c0_i32 : i32, i32
  }
  func.func @transform_1(%arg0: i32) -> (i32, i32) {
    %c0_i32 = arith.constant 0 : i32
    %c0_i32_0 = arith.constant 0 : i32
    %c0_i32_1 = arith.constant 0 : i32
    return %c0_i32, %c0_i32_0 : i32, i32
  }
  func.func @transform_2(%arg0: i32) -> (i32, i32) {
    %c0_i32 = arith.constant 0 : i32
    %c0_i32_0 = arith.constant 0 : i32
    %c0_i32_1 = arith.constant 0 : i32
    return %c0_i32, %c0_i32_0 : i32, i32
  }
  func.func @transform_3(%arg0: i32) -> (i32, i32) {
    %c0_i32 = arith.constant 0 : i32
    %c0_i32_0 = arith.constant 0 : i32
    %c0_i32_1 = arith.constant 0 : i32
    return %c0_i32, %c0_i32_0 : i32, i32
  }
  func.func @transform_4(%arg0: i32) -> (i32, i32) {
    %c0_i32 = arith.constant 0 : i32
    %c0_i32_0 = arith.constant 0 : i32
    %c0_i32_1 = arith.constant 0 : i32
    return %c0_i32, %c0_i32_0 : i32, i32
  }
  func.func @transform_5(%arg0: i32) -> (i32, i32) {
    %c0_i32 = arith.constant 0 : i32
    %c0_i32_0 = arith.constant 0 : i32
    %c0_i32_1 = arith.constant 0 : i32
    return %c0_i32, %c0_i32_0 : i32, i32
  }
  func.func @transform_6(%arg0: i32) -> (i32, i32) {
    %c0_i32 = arith.constant 0 : i32
    %c0_i32_0 = arith.constant 0 : i32
    %c0_i32_1 = arith.constant 0 : i32
    return %c0_i32, %c0_i32_0 : i32, i32
  }
  func.func @transform_7(%arg0: i32) -> (i32, i32) {
    %c0_i32 = arith.constant 0 : i32
    %c0_i32_0 = arith.constant 0 : i32
    return %arg0, %c0_i32 : i32, i32
  }
}

module attributes {stable_mosaic.version = 11 : i64} {
  func.func @_mlp_kernel(%arg0: i32, %arg1: memref<8x4xbf16, #tpu.memory_space<vmem>>, %arg2: memref<4x32xbf16, #tpu.memory_space<vmem>>, %arg3: memref<1x32xbf16, #tpu.memory_space<vmem>>, %arg4: memref<32x32xbf16, #tpu.memory_space<vmem>>, %arg5: memref<1x32xbf16, #tpu.memory_space<vmem>>, %arg6: memref<32x128xbf16, #tpu.memory_space<vmem>>, %arg7: memref<1x128xbf16, #tpu.memory_space<vmem>>, %arg8: memref<8x128xbf16, #tpu.memory_space<vmem>>) attributes {dimension_semantics = [#tpu.dimension_semantics<parallel>], iteration_bounds = array<i64: 2>, scalar_prefetch = 0 : i64, scratch_operands = 0 : i64, tpu.core_type = #tpu.core_type<tc>, window_params = [{transform_indices = @transform_0, window_bounds = array<i64: 8, 4>}, {pipeline_mode = #tpu.pipeline_mode<synchronous>, transform_indices = @transform_1, window_bounds = array<i64: 4, 32>}, {pipeline_mode = #tpu.pipeline_mode<synchronous>, transform_indices = @transform_2, window_bounds = array<i64: 1, 32>}, {pipeline_mode = #tpu.pipeline_mode<synchronous>, transform_indices = @transform_3, window_bounds = array<i64: 32, 32>}, {pipeline_mode = #tpu.pipeline_mode<synchronous>, transform_indices = @transform_4, window_bounds = array<i64: 1, 32>}, {pipeline_mode = #tpu.pipeline_mode<synchronous>, transform_indices = @transform_5, window_bounds = array<i64: 32, 128>}, {pipeline_mode = #tpu.pipeline_mode<synchronous>, transform_indices = @transform_6, window_bounds = array<i64: 1, 128>}, {transform_indices = @transform_7, window_bounds = array<i64: 8, 128>}]} {
    %c0 = arith.constant 0 : index
    %c0_0 = arith.constant 0 : index
    %0 = vector.load %arg1[%c0, %c0_0] : memref<8x4xbf16, #tpu.memory_space<vmem>>, vector<8x4xbf16>
    %c0_1 = arith.constant 0 : index
    %c0_2 = arith.constant 0 : index
    %1 = vector.load %arg2[%c0_1, %c0_2] : memref<4x32xbf16, #tpu.memory_space<vmem>>, vector<4x32xbf16>
    %c0_3 = arith.constant 0 : index
    %c0_4 = arith.constant 0 : index
    %2 = vector.load %arg3[%c0_3, %c0_4] : memref<1x32xbf16, #tpu.memory_space<vmem>>, vector<1x32xbf16>
    %cst = arith.constant dense<0.000000e+00> : vector<8x32xf32>
    %3 = tpu.matmul %0, %1, %cst {dimension_numbers = #tpu.dot_dimension_numbers<[1], [0], [0], [1], [0, 0, 1, 1], [], []>} : vector<8x4xbf16>, vector<4x32xbf16>, vector<8x32xf32> -> vector<8x32xf32>
    %4 = arith.extf %2 : vector<1x32xbf16> to vector<1x32xf32>
    %5 = vector.broadcast %4 : vector<1x32xf32> to vector<8x32xf32>
    %6 = arith.addf %3, %5 : vector<8x32xf32>
    %cst_5 = arith.constant 0.000000e+00 : f32
    %7 = vector.broadcast %cst_5 : f32 to vector<8x32xf32>
    %8 = arith.maximumf %6, %7 : vector<8x32xf32>
    %9 = arith.truncf %8 : vector<8x32xf32> to vector<8x32xbf16>
    %c0_6 = arith.constant 0 : index
    %c0_7 = arith.constant 0 : index
    %10 = vector.load %arg4[%c0_6, %c0_7] : memref<32x32xbf16, #tpu.memory_space<vmem>>, vector<32x32xbf16>
    %c0_8 = arith.constant 0 : index
    %c0_9 = arith.constant 0 : index
    %11 = vector.load %arg5[%c0_8, %c0_9] : memref<1x32xbf16, #tpu.memory_space<vmem>>, vector<1x32xbf16>
    %cst_10 = arith.constant dense<0.000000e+00> : vector<8x32xf32>
    %12 = tpu.matmul %9, %10, %cst_10 {dimension_numbers = #tpu.dot_dimension_numbers<[1], [0], [0], [1], [0, 0, 1, 1], [], []>} : vector<8x32xbf16>, vector<32x32xbf16>, vector<8x32xf32> -> vector<8x32xf32>
    %13 = arith.extf %11 : vector<1x32xbf16> to vector<1x32xf32>
    %14 = vector.broadcast %13 : vector<1x32xf32> to vector<8x32xf32>
    %15 = arith.addf %12, %14 : vector<8x32xf32>
    %cst_11 = arith.constant 0.000000e+00 : f32
    %16 = vector.broadcast %cst_11 : f32 to vector<8x32xf32>
    %17 = arith.maximumf %15, %16 : vector<8x32xf32>
    %18 = arith.truncf %17 : vector<8x32xf32> to vector<8x32xbf16>
    %c0_12 = arith.constant 0 : index
    %c0_13 = arith.constant 0 : index
    %19 = vector.load %arg6[%c0_12, %c0_13] : memref<32x128xbf16, #tpu.memory_space<vmem>>, vector<32x128xbf16>
    %c0_14 = arith.constant 0 : index
    %c0_15 = arith.constant 0 : index
    %20 = vector.load %arg7[%c0_14, %c0_15] : memref<1x128xbf16, #tpu.memory_space<vmem>>, vector<1x128xbf16>
    %cst_16 = arith.constant dense<0.000000e+00> : vector<8x128xf32>
    %21 = tpu.matmul %18, %19, %cst_16 {dimension_numbers = #tpu.dot_dimension_numbers<[1], [0], [0], [1], [0, 0, 1, 1], [], []>} : vector<8x32xbf16>, vector<32x128xbf16>, vector<8x128xf32> -> vector<8x128xf32>
    %22 = arith.extf %20 : vector<1x128xbf16> to vector<1x128xf32>
    %23 = vector.broadcast %22 : vector<1x128xf32> to vector<8x128xf32>
    %24 = arith.addf %21, %23 : vector<8x128xf32>
    %25 = arith.truncf %24 : vector<8x128xf32> to vector<8x128xbf16>
    %c0_17 = arith.constant 0 : index
    %c0_18 = arith.constant 0 : index
    %26 = vector.load %arg8[%c0_17, %c0_18] : memref<8x128xbf16, #tpu.memory_space<vmem>>, vector<8x128xbf16>
    tpu.vector_store %arg8[%c0_17, %c0_18], %25 {strides = array<i32>} : memref<8x128xbf16, #tpu.memory_space<vmem>>, vector<8x128xbf16>,
    return
  }
  func.func @transform_0(%arg0: i32) -> (i32, i32) {
    %c0_i32 = arith.constant 0 : i32
    %c0_i32_0 = arith.constant 0 : i32
    return %arg0, %c0_i32 : i32, i32
  }
  func.func @transform_1(%arg0: i32) -> (i32, i32) {
    %c0_i32 = arith.constant 0 : i32
    %c0_i32_0 = arith.constant 0 : i32
    %c0_i32_1 = arith.constant 0 : i32
    return %c0_i32, %c0_i32_0 : i32, i32
  }
  func.func @transform_2(%arg0: i32) -> (i32, i32) {
    %c0_i32 = arith.constant 0 : i32
    %c0_i32_0 = arith.constant 0 : i32
    %c0_i32_1 = arith.constant 0 : i32
    return %c0_i32, %c0_i32_0 : i32, i32
  }
  func.func @transform_3(%arg0: i32) -> (i32, i32) {
    %c0_i32 = arith.constant 0 : i32
    %c0_i32_0 = arith.constant 0 : i32
    %c0_i32_1 = arith.constant 0 : i32
    return %c0_i32, %c0_i32_0 : i32, i32
  }
  func.func @transform_4(%arg0: i32) -> (i32, i32) {
    %c0_i32 = arith.constant 0 : i32
    %c0_i32_0 = arith.constant 0 : i32
    %c0_i32_1 = arith.constant 0 : i32
    return %c0_i32, %c0_i32_0 : i32, i32
  }
  func.func @transform_5(%arg0: i32) -> (i32, i32) {
    %c0_i32 = arith.constant 0 : i32
    %c0_i32_0 = arith.constant 0 : i32
    %c0_i32_1 = arith.constant 0 : i32
    return %c0_i32, %c0_i32_0 : i32, i32
  }
  func.func @transform_6(%arg0: i32) -> (i32, i32) {
    %c0_i32 = arith.constant 0 : i32
    %c0_i32_0 = arith.constant 0 : i32
    %c0_i32_1 = arith.constant 0 : i32
    return %c0_i32, %c0_i32_0 : i32, i32
  }
  func.func @transform_7(%arg0: i32) -> (i32, i32) {
    %c0_i32 = arith.constant 0 : i32
    %c0_i32_0 = arith.constant 0 : i32
    return %arg0, %c0_i32 : i32, i32
  }
}

</mosaic_0001>

<llo_original>
// kernel: tpu_custom_call.1
$region0: #{tpu_custom_call.1}
  #allocation0 [shape = 'u32[]', space=smem, size = 0x4, offset = 0x4, fixed_abs, tag = 'smem constant byte address 0x4 - core index']
  #allocation1 [shape = 'u32[144,128]{1,0:T(1,128)}', space=vmem, size = 0x12000, scoped, tag = 'internal scratch']
  %s0 = inlined_call_operand.vmem [shape: bf16[16,4], index: 0, kind: input, shape index: {}]
  %s1 = inlined_call_operand.vmem [shape: bf16[4,32], index: 1, kind: input, shape index: {}]
  %s2 = inlined_call_operand.vmem [shape: bf16[1,32], index: 2, kind: input, shape index: {}]
  %s3 = inlined_call_operand.vmem [shape: bf16[32,32], index: 3, kind: input, shape index: {}]
  %s4 = inlined_call_operand.vmem [shape: bf16[1,32], index: 4, kind: input, shape index: {}]
  %s5 = inlined_call_operand.hbm [shape: bf16[32,128], index: 5, kind: input, shape index: {}]
  %s6 = inlined_call_operand.vmem [shape: bf16[1,128], index: 6, kind: input, shape index: {}]
  %s7 = inlined_call_operand.hbm [shape: bf16[16,128], index: 7, kind: output, shape index: {}]
  %s8 = sld [smem:[#allocation0]]
  $region65: #{tpu_custom_call.1} parent=0
    _
  %s10 = ssub.s32 1, %s8
  %s11 = scalar_select 0, %s10, %s8
  $region1: #{tpu_custom_call.1} parent=0
    #allocation2 [shape = 'u8[8192]{0}', space=vmem, size = 0x2000, scoped, tag = 'input window, operand 5, single buffered']
    #allocation3 [shape = 's32[2]{0}', space=sflag, size = 0x8, scoped, tag = 'scoped memory for tpu_custom_call.1']
    #allocation4 [shape = 's32[2]{0}', space=sflag, size = 0x8, scoped, tag = 'scoped memory for tpu_custom_call.1']
    #allocation5 [shape = 'u8[4096]{0}', space=vmem, size = 0x1000, scoped, tag = 'output window, operand 0']
    %12 = vsyncpa [#allocation3], 0
    %13 = vsyncpa [#allocation4], 0
    %s14 = scalar_lea.sflag [#allocation4], 1
    %15 = vsyncpa %s14, 0
    loop: start=0, step=1, limit=4
    $region2: #{tpu_custom_call.1} parent=1 // loop_pre_header
      _
    $region3: #{tpu_custom_call.1} parent=1 // loop_header
      %s17 = sphi 0, %s21
      %p18 = scmp.ge.s32.totalorder %s17, 4
      %s27 = sphi 0, %s29
      %s30 = sphi 0, %s27
      %s31 = sphi 0, %s30
      %s47 = sphi 0, %s31
      %s51 = sphi 0, %s51
      %s53 = sphi 0, %s51
      %s54 = sphi 0, %s53
      %s68 = sphi 0, %s54
      %s72 = sphi 0, %s72
      %s74 = sphi 0, %s72
      %s75 = sphi 0, %s74
      %s89 = sphi 0, %s75
      %s93 = sphi 0, %s93
      %s95 = sphi 0, %s93
      %s96 = sphi 0, %s95
      %s110 = sphi 0, %s96
      %s114 = sphi 0, %s114
      %s116 = sphi 0, %s114
      %s117 = sphi 0, %s116
      %s131 = sphi 0, %s117
      %s135 = sphi 0, %s135
      %s137 = sphi 0, %s135
      %s138 = sphi 0, %s137
      %s152 = sphi 0, %s138
      %s156 = sphi 0, %s156
      %s158 = sphi 0, %s156
      %s159 = sphi 0, %s158
      %s173 = sphi 0, %s159
      %s179 = sphi 0, %s181
      %s182 = sphi 0, %s179
      %s183 = sphi 0, %s182
      %s199 = sphi 0, %s183
    $region4: #{tpu_custom_call.1} parent=1 // loop_header_branch
      %20 = sbr.rel (%p18) target = $region8
    $region5: #{tpu_custom_call.1} parent=1 // loop_body
      %s22 = ssub.s32 %s17, 1
      %s23 = ssub.s32 %s17, 2
      %s24 = sadd.s32 %s17, 1
      %s25 = ssub.s32 %s17, %s24
      %p26 = scmp.eq.s32.totalorder %s25, 0
      %s28 = sadd.s32 %s27, 1
      %s29 = scalar_select %p26, %s27, %s28
      %p32 = pneg %p26
      %p33 = scmp.eq.s32.totalorder %s17, 1
      %p34 = por %p32, %p33
      %p35 = scmp.ne.s32.totalorder %s27, %s30
      %p36 = scmp.eq.s32.totalorder %s17, 0
      %p37 = por %p35, %p36
      %p38 = scmp.ne.s32.totalorder %s27, %s30
      %p39 = scmp.eq.s32.totalorder %s22, 1
      %p40 = por %p38, %p39
      %p41 = scmp.ne.s32.totalorder %s30, %s31
      %p42 = scmp.eq.s32.totalorder %s22, 0
      %p43 = por %p41, %p42
      %p44 = scmp.ne.s32.totalorder %s30, %s31
      %p45 = scmp.eq.s32.totalorder %s23, 1
      %p46 = por %p44, %p45
      %p48 = scmp.ne.s32.totalorder %s31, %s47
      %p49 = scmp.eq.s32.totalorder %s23, 0
      %p50 = por %p48, %p49
      %s52 = sadd.s32 %s51, 1
      %p55 = scmp.eq.s32.totalorder %s17, 1
      %p56 = scmp.ne.s32.totalorder %s51, %s53
      %p57 = scmp.eq.s32.totalorder %s17, 0
      %p58 = por %p56, %p57
      %p59 = scmp.ne.s32.totalorder %s51, %s53
      %p60 = scmp.eq.s32.totalorder %s22, 1
      %p61 = por %p59, %p60
      %p62 = scmp.ne.s32.totalorder %s53, %s54
      %p63 = scmp.eq.s32.totalorder %s22, 0
      %p64 = por %p62, %p63
      %p65 = scmp.ne.s32.totalorder %s53, %s54
      %p66 = scmp.eq.s32.totalorder %s23, 1
      %p67 = por %p65, %p66
      %p69 = scmp.ne.s32.totalorder %s54, %s68
      %p70 = scmp.eq.s32.totalorder %s23, 0
      %p71 = por %p69, %p70
      %s73 = sadd.s32 %s72, 1
      %p76 = scmp.eq.s32.totalorder %s17, 1
      %p77 = scmp.ne.s32.totalorder %s72, %s74
      %p78 = scmp.eq.s32.totalorder %s17, 0
      %p79 = por %p77, %p78
      %p80 = scmp.ne.s32.totalorder %s72, %s74
      %p81 = scmp.eq.s32.totalorder %s22, 1
      %p82 = por %p80, %p81
      %p83 = scmp.ne.s32.totalorder %s74, %s75
      %p84 = scmp.eq.s32.totalorder %s22, 0
      %p85 = por %p83, %p84
      %p86 = scmp.ne.s32.totalorder %s74, %s75
      %p87 = scmp.eq.s32.totalorder %s23, 1
      %p88 = por %p86, %p87
      %p90 = scmp.ne.s32.totalorder %s75, %s89
      %p91 = scmp.eq.s32.totalorder %s23, 0
      %p92 = por %p90, %p91
      %s94 = sadd.s32 %s93, 1
      %p97 = scmp.eq.s32.totalorder %s17, 1
      %p98 = scmp.ne.s32.totalorder %s93, %s95
      %p99 = scmp.eq.s32.totalorder %s17, 0
      %p100 = por %p98, %p99
      %p101 = scmp.ne.s32.totalorder %s93, %s95
      %p102 = scmp.eq.s32.totalorder %s22, 1
      %p103 = por %p101, %p102
      %p104 = scmp.ne.s32.totalorder %s95, %s96
      %p105 = scmp.eq.s32.totalorder %s22, 0
      %p106 = por %p104, %p105
      %p107 = scmp.ne.s32.totalorder %s95, %s96
      %p108 = scmp.eq.s32.totalorder %s23, 1
      %p109 = por %p107, %p108
      %p111 = scmp.ne.s32.totalorder %s96, %s110
      %p112 = scmp.eq.s32.totalorder %s23, 0
      %p113 = por %p111, %p112
      %s115 = sadd.s32 %s114, 1
      %p118 = scmp.eq.s32.totalorder %s17, 1
      %p119 = scmp.ne.s32.totalorder %s114, %s116
      %p120 = scmp.eq.s32.totalorder %s17, 0
      %p121 = por %p119, %p120
      %p122 = scmp.ne.s32.totalorder %s114, %s116
      %p123 = scmp.eq.s32.totalorder %s22, 1
      %p124 = por %p122, %p123
      %p125 = scmp.ne.s32.totalorder %s116, %s117
      %p126 = scmp.eq.s32.totalorder %s22, 0
      %p127 = por %p125, %p126
      %p128 = scmp.ne.s32.totalorder %s116, %s117
      %p129 = scmp.eq.s32.totalorder %s23, 1
      %p130 = por %p128, %p129
      %p132 = scmp.ne.s32.totalorder %s117, %s131
      %p133 = scmp.eq.s32.totalorder %s23, 0
      %p134 = por %p132, %p133
      %s136 = sadd.s32 %s135, 1
      %p139 = scmp.eq.s32.totalorder %s17, 1
      %p140 = scmp.ne.s32.totalorder %s135, %s137
      %p141 = scmp.eq.s32.totalorder %s17, 0
      %p142 = por %p140, %p141
      %p143 = scmp.ne.s32.totalorder %s135, %s137
      %p144 = scmp.eq.s32.totalorder %s22, 1
      %p145 = por %p143, %p144
      %p146 = scmp.ne.s32.totalorder %s137, %s138
      %p147 = scmp.eq.s32.totalorder %s22, 0
      %p148 = por %p146, %p147
      %p149 = scmp.ne.s32.totalorder %s137, %s138
      %p150 = scmp.eq.s32.totalorder %s23, 1
      %p151 = por %p149, %p150
      %p153 = scmp.ne.s32.totalorder %s138, %s152
      %p154 = scmp.eq.s32.totalorder %s23, 0
      %p155 = por %p153, %p154
      %s157 = sadd.s32 %s156, 1
      %p160 = scmp.eq.s32.totalorder %s17, 1
      %p161 = scmp.ne.s32.totalorder %s156, %s158
      %p162 = scmp.eq.s32.totalorder %s17, 0
      %p163 = por %p161, %p162
      %p164 = scmp.ne.s32.totalorder %s156, %s158
      %p165 = scmp.eq.s32.totalorder %s22, 1
      %p166 = por %p164, %p165
      %p167 = scmp.ne.s32.totalorder %s158, %s159
      %p168 = scmp.eq.s32.totalorder %s22, 0
      %p169 = por %p167, %p168
      %p170 = scmp.ne.s32.totalorder %s158, %s159
      %p171 = scmp.eq.s32.totalorder %s23, 1
      %p172 = por %p170, %p171
      %p174 = scmp.ne.s32.totalorder %s159, %s173
      %p175 = scmp.eq.s32.totalorder %s23, 0
      %p176 = por %p174, %p175
      %s177 = ssub.s32 %s17, %s24
      %p178 = scmp.eq.s32.totalorder %s177, 0
      %s180 = sadd.s32 %s179, 1
      %s181 = scalar_select %p178, %s179, %s180
      %p184 = pneg %p178
      %p185 = scmp.eq.s32.totalorder %s17, 1
      %p186 = por %p184, %p185
      %p187 = scmp.ne.s32.totalorder %s179, %s182
      %p188 = scmp.eq.s32.totalorder %s17, 0
      %p189 = por %p187, %p188
      %p190 = scmp.ne.s32.totalorder %s179, %s182
      %p191 = scmp.eq.s32.totalorder %s22, 1
      %p192 = por %p190, %p191
      %p193 = scmp.ne.s32.totalorder %s182, %s183
      %p194 = scmp.eq.s32.totalorder %s22, 0
      %p195 = por %p193, %p194
      %p196 = scmp.ne.s32.totalorder %s182, %s183
      %p197 = scmp.eq.s32.totalorder %s23, 1
      %p198 = por %p196, %p197
      %p200 = scmp.ne.s32.totalorder %s183, %s199
      %p201 = scmp.eq.s32.totalorder %s23, 0
      %p202 = por %p200, %p201
      %p203 = scmp.le.s32.totalorder 1, %s17
      %p204 = scmp.lt.s32.totalorder %s17, 3
      %p205 = pnand %p203, %p204
      %p206 = pneg %p205
      // Predicated region
      $region9: #{tpu_custom_call.1} parent=5 // pred_check
        _
      $region10: #{tpu_custom_call.1} parent=5 // pred_check_branch
        %208 = sbr.rel (%p205) target = $region12
      $region11: #{tpu_custom_call.1} parent=5 // pred_region
        %s209 = ssub.s32 %s17, 1
        // Predicated region
        $region13: #{tpu_custom_call.1} parent=11 // pred_check
          %p210 = pneg %p64
        $region14: #{tpu_custom_call.1} parent=11 // pred_check_branch
          %212 = sbr.rel (%p210) target = $region16
        $region15: #{tpu_custom_call.1} parent=11 // pred_region
          _
        $region16: #{tpu_custom_call.1} parent=11 // pred_fallthru
          _
        // Predicated region
        $region17: #{tpu_custom_call.1} parent=11 // pred_check
          %p213 = pneg %p85
        $region18: #{tpu_custom_call.1} parent=11 // pred_check_branch
          %215 = sbr.rel (%p213) target = $region20
        $region19: #{tpu_custom_call.1} parent=11 // pred_region
          _
        $region20: #{tpu_custom_call.1} parent=11 // pred_fallthru
          _
        // Predicated region
        $region21: #{tpu_custom_call.1} parent=11 // pred_check
          %p216 = pneg %p106
        $region22: #{tpu_custom_call.1} parent=11 // pred_check_branch
          %218 = sbr.rel (%p216) target = $region24
        $region23: #{tpu_custom_call.1} parent=11 // pred_region
          _
        $region24: #{tpu_custom_call.1} parent=11 // pred_fallthru
          _
        // Predicated region
        $region25: #{tpu_custom_call.1} parent=11 // pred_check
          %p219 = pneg %p127
        $region26: #{tpu_custom_call.1} parent=11 // pred_check_branch
          %221 = sbr.rel (%p219) target = $region28
        $region27: #{tpu_custom_call.1} parent=11 // pred_region
          _
        $region28: #{tpu_custom_call.1} parent=11 // pred_fallthru
          _
        // Predicated region
        $region29: #{tpu_custom_call.1} parent=11 // pred_check
          %p222 = pneg %p148
        $region30: #{tpu_custom_call.1} parent=11 // pred_check_branch
          %224 = sbr.rel (%p222) target = $region32
        $region31: #{tpu_custom_call.1} parent=11 // pred_region
          %s226 = ssub.s32 256, 256
          %227 = vsyncadd [#allocation3], %s226
          %s228 = sshll.u32 [#allocation2], 4
          %s229 = int_to_ptr.vmem [resolvable:$true] %s228
          %234 = dma.hbm_to_vmem [thread:$0]  %s5, 256, %s229, [#allocation3], 64, 64, 4
        $region32: #{tpu_custom_call.1} parent=11 // pred_fallthru
          _
        // Predicated region
        $region33: #{tpu_custom_call.1} parent=11 // pred_check
          %p235 = pneg %p169
        $region34: #{tpu_custom_call.1} parent=11 // pred_check_branch
          %237 = sbr.rel (%p235) target = $region36
        $region35: #{tpu_custom_call.1} parent=11 // pred_region
          _
        $region36: #{tpu_custom_call.1} parent=11 // pred_fallthru
          _
      $region12: #{tpu_custom_call.1} parent=5 // pred_fallthru
        _
      %p238 = scmp.lt.s32.totalorder %s17, 2
      // Predicated region
      $region37: #{tpu_custom_call.1} parent=5 // pred_check
        %p239 = pneg %p238
      $region38: #{tpu_custom_call.1} parent=5 // pred_check_branch
        %241 = sbr.rel (%p239) target = $region40
      $region39: #{tpu_custom_call.1} parent=5 // pred_region
        // Predicated region
        $region41: #{tpu_custom_call.1} parent=39 // pred_check
          %p242 = pneg %p37
        $region42: #{tpu_custom_call.1} parent=39 // pred_check_branch
          %244 = sbr.rel (%p242) target = $region44
        $region43: #{tpu_custom_call.1} parent=39 // pred_region
          %p245 = scmp.lt.s32.totalorder %s17, 1
          %s246 = scalar_select %p245, %s17, 1
          %s247 = smul.addr %s246, 4
          %s248 = scalar_lea.vmem %s0, %s247
        $region44: #{tpu_custom_call.1} parent=39 // pred_fallthru
          _
      $region40: #{tpu_custom_call.1} parent=5 // pred_fallthru
        _
      %p249 = scmp.le.s32.totalorder 1, %s17
      %p250 = scmp.lt.s32.totalorder %s17, 3
      %p251 = pnand %p249, %p250
      %p252 = pneg %p251
      // Predicated region
      $region45: #{tpu_custom_call.1} parent=5 // pred_check
        _
      $region46: #{tpu_custom_call.1} parent=5 // pred_check_branch
        %254 = sbr.rel (%p251) target = $region48
      $region47: #{tpu_custom_call.1} parent=5 // pred_region
        %s255 = ssub.s32 %s17, 1
        // Predicated region
        $region49: #{tpu_custom_call.1} parent=47 // pred_check
          %p256 = pneg %p148
        $region50: #{tpu_custom_call.1} parent=47 // pred_check_branch
          %258 = sbr.rel (%p256) target = $region52
        $region51: #{tpu_custom_call.1} parent=47 // pred_region
          %259 = dma.done [#allocation3], 256
        $region52: #{tpu_custom_call.1} parent=47 // pred_fallthru
          _
        %p260 = scmp.lt.s32.totalorder %s22, 1
        %s261 = scalar_select %p260, %s22, 1
        %s262 = smul.addr %s261, 4
        %s263 = scalar_lea.vmem %s0, %s262
        %p264 = pneg %p43
        %p265 = pneg %p40
        %p266 = pneg %p64
        %p267 = pneg %p61
        %p268 = pneg %p85
        %p269 = pneg %p82
        %p270 = pneg %p106
        %p271 = pneg %p103
        %p272 = pneg %p127
        %p273 = pneg %p124
        %p274 = pneg %p148
        %p275 = pneg %p145
        %p276 = pneg %p169
        %p277 = pneg %p166
        %p278 = pneg %p195
        %p279 = pneg %p192
        %s280 = sand.u32 %s182, 1
        %s281 = scalar_lea.sflag [#allocation4], %s280
        %s282 = sand.u32 %s182, 1
        %s283 = smul.addr %s282, 4
        %s284 = scalar_lea.vmem [#allocation5], %s283
        %p285 = scmp.lt.s32.totalorder %s22, 1
        %s286 = scalar_select %p285, %s22, 1
        %s287 = smul.addr %s286, 4
        %s288 = scalar_lea.vmem %s0, %s287
        %v290 = vld [vmem:[%s288] sm:$0xf]
        %v291 = vld [vmem:[%s1] sm:$0x3]
        %v292 = vld [vmem:[%s2] sm:$0x1]
        %v293 = vunpack.c.l.bf16 %v292
        %v294 = vlaneseq
        %v295 = vshrl.u32 %v294, 7
        %v296 = vsub.s32 0, %v295
        %v297 = vrot.slane %v293, %v296
        %vm298 = vcmask 31744
        %v300 = vsel %vm298, %v290, 0
        %vm302 = vcmask 1041408
        %v304 = vsel %vm302, %v291, 0
        %306 = vmatprep.subr.bf16.mxu0 0
        %307 = vmatpush1.bf16.msra.mxu0 %v304
        %308 = vmatprep.subr.bf16.mxu0 0
        %309 = vmatpush1.bf16.msra.mxu0 0
        %310 = vmatprep.subr.bf16.mxu0 0
        %311 = vmatpush1.bf16.msra.mxu0 0
        %312 = vmatprep.subr.bf16.mxu0 0
        %313 = vmatpush1.bf16.msra.mxu0 0
        %314 = vmatprep.subr.bf16.mxu0 0
        %315 = vmatpush1.bf16.msra.mxu0 0
        %316 = vmatprep.subr.bf16.mxu0 0
        %317 = vmatpush1.bf16.msra.mxu0 0
        %318 = vmatprep.subr.bf16.mxu0 0
        %319 = vmatpush1.bf16.msra.mxu0 0
        %320 = vmatprep.subr.bf16.mxu0 0
        %321 = vmatpush1.bf16.msra.mxu0 0
        %322 = vmatprep.subr.bf16.mxu0 0
        %323 = vmatpush1.bf16.msra.mxu0 0
        %324 = vmatprep.subr.bf16.mxu0 0
        %325 = vmatpush1.bf16.msra.mxu0 0
        %326 = vmatprep.subr.bf16.mxu0 0
        %327 = vmatpush1.bf16.msra.mxu0 0
        %328 = vmatprep.subr.bf16.mxu0 0
        %329 = vmatpush1.bf16.msra.mxu0 0
        %330 = vmatprep.subr.bf16.mxu0 0
        %331 = vmatpush1.bf16.msra.mxu0 0
        %332 = vmatprep.subr.bf16.mxu0 0
        %333 = vmatpush1.bf16.msra.mxu0 0
        %334 = vmatprep.subr.bf16.mxu0 0
        %335 = vmatpush1.bf16.msra.mxu0 0
        %336 = vmatprep.subr.bf16.mxu0 0
        %337 = vmatpush1.bf16.msra.mxu0 0
        %338 = vmatprep.mubr.bf16.mxu0 0
        %339 = vmatmul.mubr.bf16.gmra.mrb[0].mxu0 %v300
        %v340 = vpop.f32.mrb[0].mxu0
        %v341 = vadd.f32 %v297, %v340
        %v342 = vpop.f32.mrb[0].mxu0
        %v343 = vpop.f32.mrb[0].mxu0
        %v344 = vpop.f32.mrb[0].mxu0
        %345 = vdwg.mxu0
        %v346 = vmax.f32 %v341, 0.0
        %v347 = vpack.c.bf16 %v346, %v346
        %v348 = vld [vmem:[%s3] sm:$0xf]
        %v349 = vld [vmem:[%s3 + $0x4] sm:$0xf]
        %v350 = vld [vmem:[%s3 + $0x8] sm:$0xf]
        %v351 = vld [vmem:[%s3 + $0xc] sm:$0xf]
        %v352 = vld [vmem:[%s4] sm:$0x1]
        %v353 = vunpack.c.l.bf16 %v352
        %v354 = vlaneseq
        %v355 = vshrl.u32 %v354, 7
        %v356 = vsub.s32 0, %v355
        %v357 = vrot.slane %v353, %v356
        %v362 = vunpack.c.l.b16 %v348
        %v363 = vunpack.c.l.b16 %v349
        %v364 = vunpack.c.l.b16 %v350
        %v365 = vunpack.c.l.b16 %v351
        %v366 = vpack.c.b16 %v363, %v362
        %v367 = vpack.c.b16 %v365, %v364
        %vm370 = vcmask 261120
        %v372 = vsel %vm370, %v347, 0
        %374 = vmatprep.subr.bf16.mxu0 0
        %375 = vmatpush1.bf16.msra.mxu0 %v366
        %376 = vmatprep.subr.bf16.mxu0 0
        %377 = vmatpush1.bf16.msra.mxu0 %v367
        %378 = vmatprep.subr.bf16.mxu0 0
        %379 = vmatpush1.bf16.msra.mxu0 0
        %380 = vmatprep.subr.bf16.mxu0 0
        %381 = vmatpush1.bf16.msra.mxu0 0
        %382 = vmatprep.subr.bf16.mxu0 0
        %383 = vmatpush1.bf16.msra.mxu0 0
        %384 = vmatprep.subr.bf16.mxu0 0
        %385 = vmatpush1.bf16.msra.mxu0 0
        %386 = vmatprep.subr.bf16.mxu0 0
        %387 = vmatpush1.bf16.msra.mxu0 0
        %388 = vmatprep.subr.bf16.mxu0 0
        %389 = vmatpush1.bf16.msra.mxu0 0
        %390 = vmatprep.subr.bf16.mxu0 0
        %391 = vmatpush1.bf16.msra.mxu0 0
        %392 = vmatprep.subr.bf16.mxu0 0
        %393 = vmatpush1.bf16.msra.mxu0 0
        %394 = vmatprep.subr.bf16.mxu0 0
        %395 = vmatpush1.bf16.msra.mxu0 0
        %396 = vmatprep.subr.bf16.mxu0 0
        %397 = vmatpush1.bf16.msra.mxu0 0
        %398 = vmatprep.subr.bf16.mxu0 0
        %399 = vmatpush1.bf16.msra.mxu0 0
        %400 = vmatprep.subr.bf16.mxu0 0
        %401 = vmatpush1.bf16.msra.mxu0 0
        %402 = vmatprep.subr.bf16.mxu0 0
        %403 = vmatpush1.bf16.msra.mxu0 0
        %404 = vmatprep.subr.bf16.mxu0 0
        %405 = vmatpush1.bf16.msra.mxu0 0
        %406 = vmatprep.mubr.bf16.mxu0 0
        %407 = vmatmul.mubr.bf16.gmra.mrb[0].mxu0 %v372
        %v408 = vpop.f32.mrb[0].mxu0
        %v409 = vadd.f32 %v357, %v408
        %v410 = vpop.f32.mrb[0].mxu0
        %v411 = vpop.f32.mrb[0].mxu0
        %v412 = vpop.f32.mrb[0].mxu0
        %413 = vdwg.mxu0
        %v414 = vmax.f32 %v409, 0.0
        %v415 = vpack.c.bf16 %v414, %v414
        %v416 = vld [vmem:[#allocation2] sm:$0xf]
        %v417 = vld [vmem:[#allocation2 + $0x4] sm:$0xf]
        %v418 = vld [vmem:[#allocation2 + $0x8] sm:$0xf]
        %v419 = vld [vmem:[#allocation2 + $0xc] sm:$0xf]
        %v420 = vld [vmem:[%s6] sm:$0x1]
        %v421 = vunpack.c.l.bf16 %v420
        %v422 = vlaneseq
        %v423 = vshrl.u32 %v422, 7
        %v424 = vsub.s32 0, %v423
        %v425 = vrot.slane %v421, %v424
        %v430 = vunpack.c.l.b16 %v416
        %v431 = vunpack.c.l.b16 %v417
        %v432 = vunpack.c.l.b16 %v418
        %v433 = vunpack.c.l.b16 %v419
        %v434 = vpack.c.b16 %v431, %v430
        %v435 = vpack.c.b16 %v433, %v432
        %v439 = vsel %vm370, %v415, 0
        %441 = vmatprep.subr.bf16.mxu0 0
        %442 = vmatpush1.bf16.msra.mxu0 %v434
        %443 = vmatprep.subr.bf16.mxu0 0
        %444 = vmatpush1.bf16.msra.mxu0 %v435
        %445 = vmatprep.subr.bf16.mxu0 0
        %446 = vmatpush1.bf16.msra.mxu0 0
        %447 = vmatprep.subr.bf16.mxu0 0
        %448 = vmatpush1.bf16.msra.mxu0 0
        %449 = vmatprep.subr.bf16.mxu0 0
        %450 = vmatpush1.bf16.msra.mxu0 0
        %451 = vmatprep.subr.bf16.mxu0 0
        %452 = vmatpush1.bf16.msra.mxu0 0
        %453 = vmatprep.subr.bf16.mxu0 0
        %454 = vmatpush1.bf16.msra.mxu0 0
        %455 = vmatprep.subr.bf16.mxu0 0
        %456 = vmatpush1.bf16.msra.mxu0 0
        %457 = vmatprep.subr.bf16.mxu0 0
        %458 = vmatpush1.bf16.msra.mxu0 0
        %459 = vmatprep.subr.bf16.mxu0 0
        %460 = vmatpush1.bf16.msra.mxu0 0
        %461 = vmatprep.subr.bf16.mxu0 0
        %462 = vmatpush1.bf16.msra.mxu0 0
        %463 = vmatprep.subr.bf16.mxu0 0
        %464 = vmatpush1.bf16.msra.mxu0 0
        %465 = vmatprep.subr.bf16.mxu0 0
        %466 = vmatpush1.bf16.msra.mxu0 0
        %467 = vmatprep.subr.bf16.mxu0 0
        %468 = vmatpush1.bf16.msra.mxu0 0
        %469 = vmatprep.subr.bf16.mxu0 0
        %470 = vmatpush1.bf16.msra.mxu0 0
        %471 = vmatprep.subr.bf16.mxu0 0
        %472 = vmatpush1.bf16.msra.mxu0 0
        %473 = vmatprep.mubr.bf16.mxu0 0
        %474 = vmatmul.mubr.bf16.gmra.mrb[0].mxu0 %v439
        %v475 = vpop.f32.mrb[0].mxu0
        %v476 = vadd.f32 %v425, %v475
        %v477 = vpop.f32.mrb[0].mxu0
        %v478 = vpop.f32.mrb[0].mxu0
        %v479 = vpop.f32.mrb[0].mxu0
        %480 = vdwg.mxu0
        %v481 = vpack.c.bf16 %v476, %v476
        %482 = vst [vmem:[%s284] sm:$0xf] %v481
        %s483 = sand.u32 %s182, 1
        %s484 = scalar_lea.sflag [#allocation4], %s483
        %s485 = sand.u32 %s182, 1
        %s486 = smul.addr %s485, 4
        %s487 = scalar_lea.vmem [#allocation5], %s486
        // Predicated region
        $region53: #{tpu_custom_call.1} parent=47 // pred_check
          %p488 = pneg %p192
        $region54: #{tpu_custom_call.1} parent=47 // pred_check_branch
          %490 = sbr.rel (%p488) target = $region56
        $region55: #{tpu_custom_call.1} parent=47 // pred_region
          %s492 = ssub.s32 64, 64
          %493 = vsyncadd %s484, %s492
          %s494 = smul.addr %s22, 64
          %s495 = scalar_lea.hbm %s7, %s494
          %s497 = sshll.u32 %s487, 4
          %s498 = int_to_ptr.vmem [resolvable:$true] %s497
          %500 = dma.vmem_to_hbm [thread:$0]  %s498, 64, %s495, %s484
        $region56: #{tpu_custom_call.1} parent=47 // pred_fallthru
          _
      $region48: #{tpu_custom_call.1} parent=5 // pred_fallthru
        _
      %p501 = scmp.le.s32.totalorder 2, %s17
      // Predicated region
      $region57: #{tpu_custom_call.1} parent=5 // pred_check
        %p502 = pneg %p501
      $region58: #{tpu_custom_call.1} parent=5 // pred_check_branch
        %504 = sbr.rel (%p502) target = $region60
      $region59: #{tpu_custom_call.1} parent=5 // pred_region
        %s505 = ssub.s32 %s17, 2
        // Predicated region
        $region61: #{tpu_custom_call.1} parent=59 // pred_check
          %p506 = pneg %p198
        $region62: #{tpu_custom_call.1} parent=59 // pred_check_branch
          %508 = sbr.rel (%p506) target = $region64
        $region63: #{tpu_custom_call.1} parent=59 // pred_region
          %s509 = sand.u32 %s183, 1
          %s510 = scalar_lea.sflag [#allocation4], %s509
          %s511 = sand.u32 %s183, 1
          %s512 = smul.addr %s511, 4
          %s513 = scalar_lea.vmem [#allocation5], %s512
          %514 = dma.done %s510, 64
        $region64: #{tpu_custom_call.1} parent=59 // pred_fallthru
          _
      $region60: #{tpu_custom_call.1} parent=5 // pred_fallthru
        _
    $region6: #{tpu_custom_call.1} parent=1 // loop_footer
      %s21 = sadd.s32 1, %s17
    $region7: #{tpu_custom_call.1} parent=1 // loop_footer_branch
      %16 = sbr.rel target = $region3
    $region8: #{tpu_custom_call.1} parent=1 // loop_exit
      _
    %515 = vsyncpa [#allocation3], 1
    %s516 = scalar_lea.sflag [#allocation3], 1
    %517 = vsyncpa %s516, 1
    %518 = vsyncpa [#allocation4], 1
    %s519 = scalar_lea.sflag [#allocation4], 1
    %520 = vsyncpa %s519, 1

// kernel: tpu_custom_call.1
$region0: #{tpu_custom_call.1}
  #allocation0 [shape = 'u32[]', space=smem, size = 0x4, offset = 0x4, fixed_abs, tag = 'smem constant byte address 0x4 - core index']
  #allocation1 [shape = 'u32[144,128]{1,0:T(1,128)}', space=vmem, size = 0x12000, scoped, tag = 'internal scratch']
  %s0 = inlined_call_operand.vmem [shape: bf16[16,4], index: 0, kind: input, shape index: {}]
  %s1 = inlined_call_operand.vmem [shape: bf16[4,32], index: 1, kind: input, shape index: {}]
  %s2 = inlined_call_operand.vmem [shape: bf16[1,32], index: 2, kind: input, shape index: {}]
  %s3 = inlined_call_operand.vmem [shape: bf16[32,32], index: 3, kind: input, shape index: {}]
  %s4 = inlined_call_operand.vmem [shape: bf16[1,32], index: 4, kind: input, shape index: {}]
  %s5 = inlined_call_operand.hbm [shape: bf16[32,128], index: 5, kind: input, shape index: {}]
  %s6 = inlined_call_operand.vmem [shape: bf16[1,128], index: 6, kind: input, shape index: {}]
  %s7 = inlined_call_operand.hbm [shape: bf16[16,128], index: 7, kind: output, shape index: {}]
  %s8 = sld [smem:[#allocation0]]
  $region65: #{tpu_custom_call.1} parent=0
    _
  %s10 = ssub.s32 1, %s8
  %s11 = scalar_select 0, %s10, %s8
  $region1: #{tpu_custom_call.1} parent=0
    #allocation2 [shape = 'u8[8192]{0}', space=vmem, size = 0x2000, scoped, tag = 'input window, operand 5, single buffered']
    #allocation3 [shape = 's32[2]{0}', space=sflag, size = 0x8, scoped, tag = 'scoped memory for tpu_custom_call.1']
    #allocation4 [shape = 's32[2]{0}', space=sflag, size = 0x8, scoped, tag = 'scoped memory for tpu_custom_call.1']
    #allocation5 [shape = 'u8[4096]{0}', space=vmem, size = 0x1000, scoped, tag = 'output window, operand 0']
    %12 = vsyncpa [#allocation3], 0
    %13 = vsyncpa [#allocation4], 0
    %s14 = scalar_lea.sflag [#allocation4], 1
    %15 = vsyncpa %s14, 0
    loop: start=0, step=1, limit=4
    $region2: #{tpu_custom_call.1} parent=1 // loop_pre_header
      _
    $region3: #{tpu_custom_call.1} parent=1 // loop_header
      %s17 = sphi 0, %s21
      %p18 = scmp.ge.s32.totalorder %s17, 4
      %s27 = sphi 0, %s29
      %s30 = sphi 0, %s27
      %s31 = sphi 0, %s30
      %s47 = sphi 0, %s31
      %s51 = sphi 0, %s51
      %s53 = sphi 0, %s51
      %s54 = sphi 0, %s53
      %s68 = sphi 0, %s54
      %s72 = sphi 0, %s72
      %s74 = sphi 0, %s72
      %s75 = sphi 0, %s74
      %s89 = sphi 0, %s75
      %s93 = sphi 0, %s93
      %s95 = sphi 0, %s93
      %s96 = sphi 0, %s95
      %s110 = sphi 0, %s96
      %s114 = sphi 0, %s114
      %s116 = sphi 0, %s114
      %s117 = sphi 0, %s116
      %s131 = sphi 0, %s117
      %s135 = sphi 0, %s135
      %s137 = sphi 0, %s135
      %s138 = sphi 0, %s137
      %s152 = sphi 0, %s138
      %s156 = sphi 0, %s156
      %s158 = sphi 0, %s156
      %s159 = sphi 0, %s158
      %s173 = sphi 0, %s159
      %s179 = sphi 0, %s181
      %s182 = sphi 0, %s179
      %s183 = sphi 0, %s182
      %s199 = sphi 0, %s183
    $region4: #{tpu_custom_call.1} parent=1 // loop_header_branch
      %20 = sbr.rel (%p18) target = $region8
    $region5: #{tpu_custom_call.1} parent=1 // loop_body
      %s22 = ssub.s32 %s17, 1
      %s23 = ssub.s32 %s17, 2
      %s24 = sadd.s32 %s17, 1
      %s25 = ssub.s32 %s17, %s24
      %p26 = scmp.eq.s32.totalorder %s25, 0
      %s28 = sadd.s32 %s27, 1
      %s29 = scalar_select %p26, %s27, %s28
      %p32 = pneg %p26
      %p33 = scmp.eq.s32.totalorder %s17, 1
      %p34 = por %p32, %p33
      %p35 = scmp.ne.s32.totalorder %s27, %s30
      %p36 = scmp.eq.s32.totalorder %s17, 0
      %p37 = por %p35, %p36
      %p38 = scmp.ne.s32.totalorder %s27, %s30
      %p39 = scmp.eq.s32.totalorder %s22, 1
      %p40 = por %p38, %p39
      %p41 = scmp.ne.s32.totalorder %s30, %s31
      %p42 = scmp.eq.s32.totalorder %s22, 0
      %p43 = por %p41, %p42
      %p44 = scmp.ne.s32.totalorder %s30, %s31
      %p45 = scmp.eq.s32.totalorder %s23, 1
      %p46 = por %p44, %p45
      %p48 = scmp.ne.s32.totalorder %s31, %s47
      %p49 = scmp.eq.s32.totalorder %s23, 0
      %p50 = por %p48, %p49
      %s52 = sadd.s32 %s51, 1
      %p55 = scmp.eq.s32.totalorder %s17, 1
      %p56 = scmp.ne.s32.totalorder %s51, %s53
      %p57 = scmp.eq.s32.totalorder %s17, 0
      %p58 = por %p56, %p57
      %p59 = scmp.ne.s32.totalorder %s51, %s53
      %p60 = scmp.eq.s32.totalorder %s22, 1
      %p61 = por %p59, %p60
      %p62 = scmp.ne.s32.totalorder %s53, %s54
      %p63 = scmp.eq.s32.totalorder %s22, 0
      %p64 = por %p62, %p63
      %p65 = scmp.ne.s32.totalorder %s53, %s54
      %p66 = scmp.eq.s32.totalorder %s23, 1
      %p67 = por %p65, %p66
      %p69 = scmp.ne.s32.totalorder %s54, %s68
      %p70 = scmp.eq.s32.totalorder %s23, 0
      %p71 = por %p69, %p70
      %s73 = sadd.s32 %s72, 1
      %p76 = scmp.eq.s32.totalorder %s17, 1
      %p77 = scmp.ne.s32.totalorder %s72, %s74
      %p78 = scmp.eq.s32.totalorder %s17, 0
      %p79 = por %p77, %p78
      %p80 = scmp.ne.s32.totalorder %s72, %s74
      %p81 = scmp.eq.s32.totalorder %s22, 1
      %p82 = por %p80, %p81
      %p83 = scmp.ne.s32.totalorder %s74, %s75
      %p84 = scmp.eq.s32.totalorder %s22, 0
      %p85 = por %p83, %p84
      %p86 = scmp.ne.s32.totalorder %s74, %s75
      %p87 = scmp.eq.s32.totalorder %s23, 1
      %p88 = por %p86, %p87
      %p90 = scmp.ne.s32.totalorder %s75, %s89
      %p91 = scmp.eq.s32.totalorder %s23, 0
      %p92 = por %p90, %p91
      %s94 = sadd.s32 %s93, 1
      %p97 = scmp.eq.s32.totalorder %s17, 1
      %p98 = scmp.ne.s32.totalorder %s93, %s95
      %p99 = scmp.eq.s32.totalorder %s17, 0
      %p100 = por %p98, %p99
      %p101 = scmp.ne.s32.totalorder %s93, %s95
      %p102 = scmp.eq.s32.totalorder %s22, 1
      %p103 = por %p101, %p102
      %p104 = scmp.ne.s32.totalorder %s95, %s96
      %p105 = scmp.eq.s32.totalorder %s22, 0
      %p106 = por %p104, %p105
      %p107 = scmp.ne.s32.totalorder %s95, %s96
      %p108 = scmp.eq.s32.totalorder %s23, 1
      %p109 = por %p107, %p108
      %p111 = scmp.ne.s32.totalorder %s96, %s110
      %p112 = scmp.eq.s32.totalorder %s23, 0
      %p113 = por %p111, %p112
      %s115 = sadd.s32 %s114, 1
      %p118 = scmp.eq.s32.totalorder %s17, 1
      %p119 = scmp.ne.s32.totalorder %s114, %s116
      %p120 = scmp.eq.s32.totalorder %s17, 0
      %p121 = por %p119, %p120
      %p122 = scmp.ne.s32.totalorder %s114, %s116
      %p123 = scmp.eq.s32.totalorder %s22, 1
      %p124 = por %p122, %p123
      %p125 = scmp.ne.s32.totalorder %s116, %s117
      %p126 = scmp.eq.s32.totalorder %s22, 0
      %p127 = por %p125, %p126
      %p128 = scmp.ne.s32.totalorder %s116, %s117
      %p129 = scmp.eq.s32.totalorder %s23, 1
      %p130 = por %p128, %p129
      %p132 = scmp.ne.s32.totalorder %s117, %s131
      %p133 = scmp.eq.s32.totalorder %s23, 0
      %p134 = por %p132, %p133
      %s136 = sadd.s32 %s135, 1
      %p139 = scmp.eq.s32.totalorder %s17, 1
      %p140 = scmp.ne.s32.totalorder %s135, %s137
      %p141 = scmp.eq.s32.totalorder %s17, 0
      %p142 = por %p140, %p141
      %p143 = scmp.ne.s32.totalorder %s135, %s137
      %p144 = scmp.eq.s32.totalorder %s22, 1
      %p145 = por %p143, %p144
      %p146 = scmp.ne.s32.totalorder %s137, %s138
      %p147 = scmp.eq.s32.totalorder %s22, 0
      %p148 = por %p146, %p147
      %p149 = scmp.ne.s32.totalorder %s137, %s138
      %p150 = scmp.eq.s32.totalorder %s23, 1
      %p151 = por %p149, %p150
      %p153 = scmp.ne.s32.totalorder %s138, %s152
      %p154 = scmp.eq.s32.totalorder %s23, 0
      %p155 = por %p153, %p154
      %s157 = sadd.s32 %s156, 1
      %p160 = scmp.eq.s32.totalorder %s17, 1
      %p161 = scmp.ne.s32.totalorder %s156, %s158
      %p162 = scmp.eq.s32.totalorder %s17, 0
      %p163 = por %p161, %p162
      %p164 = scmp.ne.s32.totalorder %s156, %s158
      %p165 = scmp.eq.s32.totalorder %s22, 1
      %p166 = por %p164, %p165
      %p167 = scmp.ne.s32.totalorder %s158, %s159
      %p168 = scmp.eq.s32.totalorder %s22, 0
      %p169 = por %p167, %p168
      %p170 = scmp.ne.s32.totalorder %s158, %s159
      %p171 = scmp.eq.s32.totalorder %s23, 1
      %p172 = por %p170, %p171
      %p174 = scmp.ne.s32.totalorder %s159, %s173
      %p175 = scmp.eq.s32.totalorder %s23, 0
      %p176 = por %p174, %p175
      %s177 = ssub.s32 %s17, %s24
      %p178 = scmp.eq.s32.totalorder %s177, 0
      %s180 = sadd.s32 %s179, 1
      %s181 = scalar_select %p178, %s179, %s180
      %p184 = pneg %p178
      %p185 = scmp.eq.s32.totalorder %s17, 1
      %p186 = por %p184, %p185
      %p187 = scmp.ne.s32.totalorder %s179, %s182
      %p188 = scmp.eq.s32.totalorder %s17, 0
      %p189 = por %p187, %p188
      %p190 = scmp.ne.s32.totalorder %s179, %s182
      %p191 = scmp.eq.s32.totalorder %s22, 1
      %p192 = por %p190, %p191
      %p193 = scmp.ne.s32.totalorder %s182, %s183
      %p194 = scmp.eq.s32.totalorder %s22, 0
      %p195 = por %p193, %p194
      %p196 = scmp.ne.s32.totalorder %s182, %s183
      %p197 = scmp.eq.s32.totalorder %s23, 1
      %p198 = por %p196, %p197
      %p200 = scmp.ne.s32.totalorder %s183, %s199
      %p201 = scmp.eq.s32.totalorder %s23, 0
      %p202 = por %p200, %p201
      %p203 = scmp.le.s32.totalorder 1, %s17
      %p204 = scmp.lt.s32.totalorder %s17, 3
      %p205 = pnand %p203, %p204
      %p206 = pneg %p205
      // Predicated region
      $region9: #{tpu_custom_call.1} parent=5 // pred_check
        _
      $region10: #{tpu_custom_call.1} parent=5 // pred_check_branch
        %208 = sbr.rel (%p205) target = $region12
      $region11: #{tpu_custom_call.1} parent=5 // pred_region
        %s209 = ssub.s32 %s17, 1
        // Predicated region
        $region13: #{tpu_custom_call.1} parent=11 // pred_check
          %p210 = pneg %p64
        $region14: #{tpu_custom_call.1} parent=11 // pred_check_branch
          %212 = sbr.rel (%p210) target = $region16
        $region15: #{tpu_custom_call.1} parent=11 // pred_region
          _
        $region16: #{tpu_custom_call.1} parent=11 // pred_fallthru
          _
        // Predicated region
        $region17: #{tpu_custom_call.1} parent=11 // pred_check
          %p213 = pneg %p85
        $region18: #{tpu_custom_call.1} parent=11 // pred_check_branch
          %215 = sbr.rel (%p213) target = $region20
        $region19: #{tpu_custom_call.1} parent=11 // pred_region
          _
        $region20: #{tpu_custom_call.1} parent=11 // pred_fallthru
          _
        // Predicated region
        $region21: #{tpu_custom_call.1} parent=11 // pred_check
          %p216 = pneg %p106
        $region22: #{tpu_custom_call.1} parent=11 // pred_check_branch
          %218 = sbr.rel (%p216) target = $region24
        $region23: #{tpu_custom_call.1} parent=11 // pred_region
          _
        $region24: #{tpu_custom_call.1} parent=11 // pred_fallthru
          _
        // Predicated region
        $region25: #{tpu_custom_call.1} parent=11 // pred_check
          %p219 = pneg %p127
        $region26: #{tpu_custom_call.1} parent=11 // pred_check_branch
          %221 = sbr.rel (%p219) target = $region28
        $region27: #{tpu_custom_call.1} parent=11 // pred_region
          _
        $region28: #{tpu_custom_call.1} parent=11 // pred_fallthru
          _
        // Predicated region
        $region29: #{tpu_custom_call.1} parent=11 // pred_check
          %p222 = pneg %p148
        $region30: #{tpu_custom_call.1} parent=11 // pred_check_branch
          %224 = sbr.rel (%p222) target = $region32
        $region31: #{tpu_custom_call.1} parent=11 // pred_region
          %s226 = ssub.s32 256, 256
          %227 = vsyncadd [#allocation3], %s226
          %s228 = sshll.u32 [#allocation2], 4
          %s229 = int_to_ptr.vmem [resolvable:$true] %s228
          %234 = dma.hbm_to_vmem [thread:$0]  %s5, 256, %s229, [#allocation3], 64, 64, 4
        $region32: #{tpu_custom_call.1} parent=11 // pred_fallthru
          _
        // Predicated region
        $region33: #{tpu_custom_call.1} parent=11 // pred_check
          %p235 = pneg %p169
        $region34: #{tpu_custom_call.1} parent=11 // pred_check_branch
          %237 = sbr.rel (%p235) target = $region36
        $region35: #{tpu_custom_call.1} parent=11 // pred_region
          _
        $region36: #{tpu_custom_call.1} parent=11 // pred_fallthru
          _
      $region12: #{tpu_custom_call.1} parent=5 // pred_fallthru
        _
      %p238 = scmp.lt.s32.totalorder %s17, 2
      // Predicated region
      $region37: #{tpu_custom_call.1} parent=5 // pred_check
        %p239 = pneg %p238
      $region38: #{tpu_custom_call.1} parent=5 // pred_check_branch
        %241 = sbr.rel (%p239) target = $region40
      $region39: #{tpu_custom_call.1} parent=5 // pred_region
        // Predicated region
        $region41: #{tpu_custom_call.1} parent=39 // pred_check
          %p242 = pneg %p37
        $region42: #{tpu_custom_call.1} parent=39 // pred_check_branch
          %244 = sbr.rel (%p242) target = $region44
        $region43: #{tpu_custom_call.1} parent=39 // pred_region
          %p245 = scmp.lt.s32.totalorder %s17, 1
          %s246 = scalar_select %p245, %s17, 1
          %s247 = smul.addr %s246, 4
          %s248 = scalar_lea.vmem %s0, %s247
        $region44: #{tpu_custom_call.1} parent=39 // pred_fallthru
          _
      $region40: #{tpu_custom_call.1} parent=5 // pred_fallthru
        _
      %p249 = scmp.le.s32.totalorder 1, %s17
      %p250 = scmp.lt.s32.totalorder %s17, 3
      %p251 = pnand %p249, %p250
      %p252 = pneg %p251
      // Predicated region
      $region45: #{tpu_custom_call.1} parent=5 // pred_check
        _
      $region46: #{tpu_custom_call.1} parent=5 // pred_check_branch
        %254 = sbr.rel (%p251) target = $region48
      $region47: #{tpu_custom_call.1} parent=5 // pred_region
        %s255 = ssub.s32 %s17, 1
        // Predicated region
        $region49: #{tpu_custom_call.1} parent=47 // pred_check
          %p256 = pneg %p148
        $region50: #{tpu_custom_call.1} parent=47 // pred_check_branch
          %258 = sbr.rel (%p256) target = $region52
        $region51: #{tpu_custom_call.1} parent=47 // pred_region
          %259 = dma.done [#allocation3], 256
        $region52: #{tpu_custom_call.1} parent=47 // pred_fallthru
          _
        %p260 = scmp.lt.s32.totalorder %s22, 1
        %s261 = scalar_select %p260, %s22, 1
        %s262 = smul.addr %s261, 4
        %s263 = scalar_lea.vmem %s0, %s262
        %p264 = pneg %p43
        %p265 = pneg %p40
        %p266 = pneg %p64
        %p267 = pneg %p61
        %p268 = pneg %p85
        %p269 = pneg %p82
        %p270 = pneg %p106
        %p271 = pneg %p103
        %p272 = pneg %p127
        %p273 = pneg %p124
        %p274 = pneg %p148
        %p275 = pneg %p145
        %p276 = pneg %p169
        %p277 = pneg %p166
        %p278 = pneg %p195
        %p279 = pneg %p192
        %s280 = sand.u32 %s182, 1
        %s281 = scalar_lea.sflag [#allocation4], %s280
        %s282 = sand.u32 %s182, 1
        %s283 = smul.addr %s282, 4
        %s284 = scalar_lea.vmem [#allocation5], %s283
        %p285 = scmp.lt.s32.totalorder %s22, 1
        %s286 = scalar_select %p285, %s22, 1
        %s287 = smul.addr %s286, 4
        %s288 = scalar_lea.vmem %s0, %s287
        %v290 = vld [vmem:[%s288] sm:$0xf]
        %v291 = vld [vmem:[%s1] sm:$0x3]
        %v292 = vld [vmem:[%s2] sm:$0x1]
        %v293 = vunpack.c.l.bf16 %v292
        %v294 = vlaneseq
        %v295 = vshrl.u32 %v294, 7
        %v296 = vsub.s32 0, %v295
        %v297 = vrot.slane %v293, %v296
        %vm298 = vcmask 31744
        %v300 = vsel %vm298, %v290, 0
        %vm302 = vcmask 1041408
        %v304 = vsel %vm302, %v291, 0
        %306 = vmatprep.subr.bf16.mxu0 0
        %307 = vmatpush1.bf16.msra.mxu0 %v304
        %308 = vmatprep.subr.bf16.mxu0 0
        %309 = vmatpush1.bf16.msra.mxu0 0
        %310 = vmatprep.subr.bf16.mxu0 0
        %311 = vmatpush1.bf16.msra.mxu0 0
        %312 = vmatprep.subr.bf16.mxu0 0
        %313 = vmatpush1.bf16.msra.mxu0 0
        %314 = vmatprep.subr.bf16.mxu0 0
        %315 = vmatpush1.bf16.msra.mxu0 0
        %316 = vmatprep.subr.bf16.mxu0 0
        %317 = vmatpush1.bf16.msra.mxu0 0
        %318 = vmatprep.subr.bf16.mxu0 0
        %319 = vmatpush1.bf16.msra.mxu0 0
        %320 = vmatprep.subr.bf16.mxu0 0
        %321 = vmatpush1.bf16.msra.mxu0 0
        %322 = vmatprep.subr.bf16.mxu0 0
        %323 = vmatpush1.bf16.msra.mxu0 0
        %324 = vmatprep.subr.bf16.mxu0 0
        %325 = vmatpush1.bf16.msra.mxu0 0
        %326 = vmatprep.subr.bf16.mxu0 0
        %327 = vmatpush1.bf16.msra.mxu0 0
        %328 = vmatprep.subr.bf16.mxu0 0
        %329 = vmatpush1.bf16.msra.mxu0 0
        %330 = vmatprep.subr.bf16.mxu0 0
        %331 = vmatpush1.bf16.msra.mxu0 0
        %332 = vmatprep.subr.bf16.mxu0 0
        %333 = vmatpush1.bf16.msra.mxu0 0
        %334 = vmatprep.subr.bf16.mxu0 0
        %335 = vmatpush1.bf16.msra.mxu0 0
        %336 = vmatprep.subr.bf16.mxu0 0
        %337 = vmatpush1.bf16.msra.mxu0 0
        %338 = vmatprep.mubr.bf16.mxu0 0
        %339 = vmatmul.mubr.bf16.gmra.mrb[0].mxu0 %v300
        %v340 = vpop.f32.mrb[0].mxu0
        %v341 = vadd.f32 %v297, %v340
        %v342 = vpop.f32.mrb[0].mxu0
        %v343 = vpop.f32.mrb[0].mxu0
        %v344 = vpop.f32.mrb[0].mxu0
        %345 = vdwg.mxu0
        %v346 = vmax.f32 %v341, 0.0
        %v347 = vpack.c.bf16 %v346, %v346
        %v348 = vld [vmem:[%s3] sm:$0xf]
        %v349 = vld [vmem:[%s3 + $0x4] sm:$0xf]
        %v350 = vld [vmem:[%s3 + $0x8] sm:$0xf]
        %v351 = vld [vmem:[%s3 + $0xc] sm:$0xf]
        %v352 = vld [vmem:[%s4] sm:$0x1]
        %v353 = vunpack.c.l.bf16 %v352
        %v354 = vlaneseq
        %v355 = vshrl.u32 %v354, 7
        %v356 = vsub.s32 0, %v355
        %v357 = vrot.slane %v353, %v356
        %v362 = vunpack.c.l.b16 %v348
        %v363 = vunpack.c.l.b16 %v349
        %v364 = vunpack.c.l.b16 %v350
        %v365 = vunpack.c.l.b16 %v351
        %v366 = vpack.c.b16 %v363, %v362
        %v367 = vpack.c.b16 %v365, %v364
        %vm370 = vcmask 261120
        %v372 = vsel %vm370, %v347, 0
        %374 = vmatprep.subr.bf16.mxu0 0
        %375 = vmatpush1.bf16.msra.mxu0 %v366
        %376 = vmatprep.subr.bf16.mxu0 0
        %377 = vmatpush1.bf16.msra.mxu0 %v367
        %378 = vmatprep.subr.bf16.mxu0 0
        %379 = vmatpush1.bf16.msra.mxu0 0
        %380 = vmatprep.subr.bf16.mxu0 0
        %381 = vmatpush1.bf16.msra.mxu0 0
        %382 = vmatprep.subr.bf16.mxu0 0
        %383 = vmatpush1.bf16.msra.mxu0 0
        %384 = vmatprep.subr.bf16.mxu0 0
        %385 = vmatpush1.bf16.msra.mxu0 0
        %386 = vmatprep.subr.bf16.mxu0 0
        %387 = vmatpush1.bf16.msra.mxu0 0
        %388 = vmatprep.subr.bf16.mxu0 0
        %389 = vmatpush1.bf16.msra.mxu0 0
        %390 = vmatprep.subr.bf16.mxu0 0
        %391 = vmatpush1.bf16.msra.mxu0 0
        %392 = vmatprep.subr.bf16.mxu0 0
        %393 = vmatpush1.bf16.msra.mxu0 0
        %394 = vmatprep.subr.bf16.mxu0 0
        %395 = vmatpush1.bf16.msra.mxu0 0
        %396 = vmatprep.subr.bf16.mxu0 0
        %397 = vmatpush1.bf16.msra.mxu0 0
        %398 = vmatprep.subr.bf16.mxu0 0
        %399 = vmatpush1.bf16.msra.mxu0 0
        %400 = vmatprep.subr.bf16.mxu0 0
        %401 = vmatpush1.bf16.msra.mxu0 0
        %402 = vmatprep.subr.bf16.mxu0 0
        %403 = vmatpush1.bf16.msra.mxu0 0
        %404 = vmatprep.subr.bf16.mxu0 0
        %405 = vmatpush1.bf16.msra.mxu0 0
        %406 = vmatprep.mubr.bf16.mxu0 0
        %407 = vmatmul.mubr.bf16.gmra.mrb[0].mxu0 %v372
        %v408 = vpop.f32.mrb[0].mxu0
        %v409 = vadd.f32 %v357, %v408
        %v410 = vpop.f32.mrb[0].mxu0
        %v411 = vpop.f32.mrb[0].mxu0
        %v412 = vpop.f32.mrb[0].mxu0
        %413 = vdwg.mxu0
        %v414 = vmax.f32 %v409, 0.0
        %v415 = vpack.c.bf16 %v414, %v414
        %v416 = vld [vmem:[#allocation2] sm:$0xf]
        %v417 = vld [vmem:[#allocation2 + $0x4] sm:$0xf]
        %v418 = vld [vmem:[#allocation2 + $0x8] sm:$0xf]
        %v419 = vld [vmem:[#allocation2 + $0xc] sm:$0xf]
        %v420 = vld [vmem:[%s6] sm:$0x1]
        %v421 = vunpack.c.l.bf16 %v420
        %v422 = vlaneseq
        %v423 = vshrl.u32 %v422, 7
        %v424 = vsub.s32 0, %v423
        %v425 = vrot.slane %v421, %v424
        %v430 = vunpack.c.l.b16 %v416
        %v431 = vunpack.c.l.b16 %v417
        %v432 = vunpack.c.l.b16 %v418
        %v433 = vunpack.c.l.b16 %v419
        %v434 = vpack.c.b16 %v431, %v430
        %v435 = vpack.c.b16 %v433, %v432
        %v439 = vsel %vm370, %v415, 0
        %441 = vmatprep.subr.bf16.mxu0 0
        %442 = vmatpush1.bf16.msra.mxu0 %v434
        %443 = vmatprep.subr.bf16.mxu0 0
        %444 = vmatpush1.bf16.msra.mxu0 %v435
        %445 = vmatprep.subr.bf16.mxu0 0
        %446 = vmatpush1.bf16.msra.mxu0 0
        %447 = vmatprep.subr.bf16.mxu0 0
        %448 = vmatpush1.bf16.msra.mxu0 0
        %449 = vmatprep.subr.bf16.mxu0 0
        %450 = vmatpush1.bf16.msra.mxu0 0
        %451 = vmatprep.subr.bf16.mxu0 0
        %452 = vmatpush1.bf16.msra.mxu0 0
        %453 = vmatprep.subr.bf16.mxu0 0
        %454 = vmatpush1.bf16.msra.mxu0 0
        %455 = vmatprep.subr.bf16.mxu0 0
        %456 = vmatpush1.bf16.msra.mxu0 0
        %457 = vmatprep.subr.bf16.mxu0 0
        %458 = vmatpush1.bf16.msra.mxu0 0
        %459 = vmatprep.subr.bf16.mxu0 0
        %460 = vmatpush1.bf16.msra.mxu0 0
        %461 = vmatprep.subr.bf16.mxu0 0
        %462 = vmatpush1.bf16.msra.mxu0 0
        %463 = vmatprep.subr.bf16.mxu0 0
        %464 = vmatpush1.bf16.msra.mxu0 0
        %465 = vmatprep.subr.bf16.mxu0 0
        %466 = vmatpush1.bf16.msra.mxu0 0
        %467 = vmatprep.subr.bf16.mxu0 0
        %468 = vmatpush1.bf16.msra.mxu0 0
        %469 = vmatprep.subr.bf16.mxu0 0
        %470 = vmatpush1.bf16.msra.mxu0 0
        %471 = vmatprep.subr.bf16.mxu0 0
        %472 = vmatpush1.bf16.msra.mxu0 0
        %473 = vmatprep.mubr.bf16.mxu0 0
        %474 = vmatmul.mubr.bf16.gmra.mrb[0].mxu0 %v439
        %v475 = vpop.f32.mrb[0].mxu0
        %v476 = vadd.f32 %v425, %v475
        %v477 = vpop.f32.mrb[0].mxu0
        %v478 = vpop.f32.mrb[0].mxu0
        %v479 = vpop.f32.mrb[0].mxu0
        %480 = vdwg.mxu0
        %v481 = vpack.c.bf16 %v476, %v476
        %482 = vst [vmem:[%s284] sm:$0xf] %v481
        %s483 = sand.u32 %s182, 1
        %s484 = scalar_lea.sflag [#allocation4], %s483
        %s485 = sand.u32 %s182, 1
        %s486 = smul.addr %s485, 4
        %s487 = scalar_lea.vmem [#allocation5], %s486
        // Predicated region
        $region53: #{tpu_custom_call.1} parent=47 // pred_check
          %p488 = pneg %p192
        $region54: #{tpu_custom_call.1} parent=47 // pred_check_branch
          %490 = sbr.rel (%p488) target = $region56
        $region55: #{tpu_custom_call.1} parent=47 // pred_region
          %s492 = ssub.s32 64, 64
          %493 = vsyncadd %s484, %s492
          %s494 = smul.addr %s22, 64
          %s495 = scalar_lea.hbm %s7, %s494
          %s497 = sshll.u32 %s487, 4
          %s498 = int_to_ptr.vmem [resolvable:$true] %s497
          %500 = dma.vmem_to_hbm [thread:$0]  %s498, 64, %s495, %s484
        $region56: #{tpu_custom_call.1} parent=47 // pred_fallthru
          _
      $region48: #{tpu_custom_call.1} parent=5 // pred_fallthru
        _
      %p501 = scmp.le.s32.totalorder 2, %s17
      // Predicated region
      $region57: #{tpu_custom_call.1} parent=5 // pred_check
        %p502 = pneg %p501
      $region58: #{tpu_custom_call.1} parent=5 // pred_check_branch
        %504 = sbr.rel (%p502) target = $region60
      $region59: #{tpu_custom_call.1} parent=5 // pred_region
        %s505 = ssub.s32 %s17, 2
        // Predicated region
        $region61: #{tpu_custom_call.1} parent=59 // pred_check
          %p506 = pneg %p198
        $region62: #{tpu_custom_call.1} parent=59 // pred_check_branch
          %508 = sbr.rel (%p506) target = $region64
        $region63: #{tpu_custom_call.1} parent=59 // pred_region
          %s509 = sand.u32 %s183, 1
          %s510 = scalar_lea.sflag [#allocation4], %s509
          %s511 = sand.u32 %s183, 1
          %s512 = smul.addr %s511, 4
          %s513 = scalar_lea.vmem [#allocation5], %s512
          %514 = dma.done %s510, 64
        $region64: #{tpu_custom_call.1} parent=59 // pred_fallthru
          _
      $region60: #{tpu_custom_call.1} parent=5 // pred_fallthru
        _
    $region6: #{tpu_custom_call.1} parent=1 // loop_footer
      %s21 = sadd.s32 1, %s17
    $region7: #{tpu_custom_call.1} parent=1 // loop_footer_branch
      %16 = sbr.rel target = $region3
    $region8: #{tpu_custom_call.1} parent=1 // loop_exit
      _
    %515 = vsyncpa [#allocation3], 1
    %s516 = scalar_lea.sflag [#allocation3], 1
    %517 = vsyncpa %s516, 1
    %518 = vsyncpa [#allocation4], 1
    %s519 = scalar_lea.sflag [#allocation4], 1
    %520 = vsyncpa %s519, 1

</llo_original>
